<compile_context>
chip_gen: v5e
topology: v5e:2x2
jax: 0.10.0
libtpu: 0.0.40
codegen_flags: <defaults>
</compile_context>

<pallas_src>
import functools

import jax
import jax.numpy as jnp
from jax.experimental import pallas as pl
from jax.experimental.pallas import tpu as pltpu


def _l2n_kernel_chan(x_ref, o_ref, *, eps):
    # x_ref: (bn, C, block_l) -- reduce over the channel (sublane) axis.
    x = x_ref[...].astype(jnp.float32)
    ss = jnp.sum(x * x, axis=1, keepdims=True)          # (bn, 1, block_l)
    inv = 1.0 / (jnp.sqrt(ss) + eps)                     # exact: matches torch.norm + eps
    o_ref[...] = (x * inv).astype(o_ref.dtype)


def _l2n_kernel_row(x_ref, o_ref, *, eps):
    # x_ref: (bn, C) -- 2-D input, reduce over the lane (last) axis.
    x = x_ref[...].astype(jnp.float32)
    ss = jnp.sum(x * x, axis=-1, keepdims=True)          # (bn, 1)
    inv = 1.0 / (jnp.sqrt(ss) + eps)
    o_ref[...] = (x * inv).astype(o_ref.dtype)


def _pick_block_l(L, C, itemsize):
    """Lane-dense spatial block: multiple of 128 dividing L, byte-budgeted."""
    if L % 128 != 0:
        return L  # full extent satisfies the (8,128) block rule
    budget = 512 * 1024  # bytes for one (C, block_l) slab in the input dtype
    block_l = 128
    while (block_l * 2 <= L and L % (block_l * 2) == 0
           and C * (block_l * 2) * itemsize <= budget):
        block_l *= 2
    return block_l


def _pick_block_n(N, per_n_bytes):
    """Batch block: divisor of N, byte-budgeted so double-buffering fits VMEM."""
    budget = 2 * 1024 * 1024
    bn = 1
    while bn * 2 <= N and N % (bn * 2) == 0 and (bn * 2) * per_n_bytes <= budget:
        bn *= 2
    return bn


def l2n(x, eps=1e-6):
    """L2-normalize over dim=1, matching torch: x / (norm(x, 2, dim=1, keepdim) + eps)."""
    orig_shape = x.shape
    assert x.ndim >= 2, "L2N expects at least 2 dims"
    N, C = orig_shape[0], orig_shape[1]
    itemsize = jnp.dtype(x.dtype).itemsize

    if x.ndim == 2:
        # Reduction axis is already the last (lane) axis; tile rows only.
        if N % 8 == 0:
            bn = _pick_block_n(N, C * itemsize)
            bn = max(8, bn - (bn % 8)) if bn >= 8 else N
            if N % bn != 0:
                bn = N
        else:
            bn = N
        grid = (N // bn,)
        out = pl.pallas_call(
            functools.partial(_l2n_kernel_row, eps=eps),
            out_shape=jax.ShapeDtypeStruct((N, C), x.dtype),
            grid=grid,
            in_specs=[pl.BlockSpec((bn, C), lambda i: (i, 0))],
            out_specs=pl.BlockSpec((bn, C), lambda i: (i, 0)),
            compiler_params=pltpu.CompilerParams(
                dimension_semantics=("parallel",)),
        )(x)
        return out

    # ND (N, C, *spatial): collapse spatial dims into a lane-dense last axis.
    L = 1
    for d in orig_shape[2:]:
        L *= d
    x3 = x.reshape(N, C, L)

    block_l = _pick_block_l(L, C, itemsize)
    block_n = _pick_block_n(N, C * block_l * itemsize)

    grid = (N // block_n, L // block_l)
    out = pl.pallas_call(
        functools.partial(_l2n_kernel_chan, eps=eps),
        out_shape=jax.ShapeDtypeStruct((N, C, L), x.dtype),
        grid=grid,
        in_specs=[pl.BlockSpec((block_n, C, block_l), lambda n, l: (n, 0, l))],
        out_specs=pl.BlockSpec((block_n, C, block_l), lambda n, l: (n, 0, l)),
        compiler_params=pltpu.CompilerParams(
            dimension_semantics=("parallel", "parallel")),
    )(x3)
    return out.reshape(orig_shape)


if __name__ == "__main__":
    key = jax.random.PRNGKey(0)

    # Small shapes consistent with the module: NCHW activations.
    N, C, H, W = 2, 4, 16, 16
    eps = 1e-6
    x = jax.random.normal(key, (N, C, H, W), jnp.float32)

    out = l2n(x, eps=eps)
    out = jax.block_until_ready(out)

    # Pure-JAX reference matching torch semantics exactly.
    norm = jnp.sqrt(jnp.sum(x * x, axis=1, keepdims=True))
    ref = x / (norm + eps)
    assert out.shape == ref.shape == (N, C, H, W)
    assert jnp.allclose(out, ref, rtol=1e-5, atol=1e-5), float(
        jnp.max(jnp.abs(out - ref)))

    # Also exercise the 2-D (N, C) path of the same module.
    x2 = jax.random.normal(jax.random.PRNGKey(1), (8, 32), jnp.float32)
    out2 = jax.block_until_ready(l2n(x2, eps=eps))
    ref2 = x2 / (jnp.sqrt(jnp.sum(x2 * x2, axis=1, keepdims=True)) + eps)
    assert jnp.allclose(out2, ref2, rtol=1e-5, atol=1e-5), float(
        jnp.max(jnp.abs(out2 - ref2)))

    print("KERNEL_OK")
</pallas_src>

<mosaic_0001>
module attributes {stable_mosaic.version = 11 : i64} {
  func.func @_l2n_kernel_chan(%arg0: i32, %arg1: i32, %arg2: memref<2x4x256xf32, #tpu.memory_space<vmem>>, %arg3: memref<2x4x256xf32, #tpu.memory_space<vmem>>) attributes {dimension_semantics = [#tpu.dimension_semantics<parallel>, #tpu.dimension_semantics<parallel>], iteration_bounds = array<i64: 1, 1>, scalar_prefetch = 0 : i64, scratch_operands = 0 : i64, tpu.core_type = #tpu.core_type<tc>, window_params = [{transform_indices = @transform_0, window_bounds = array<i64: 2, 4, 256>}, {transform_indices = @transform_1, window_bounds = array<i64: 2, 4, 256>}]} {
    %c0 = arith.constant 0 : index
    %c0_0 = arith.constant 0 : index
    %c0_1 = arith.constant 0 : index
    %0 = vector.load %arg2[%c0, %c0_0, %c0_1] : memref<2x4x256xf32, #tpu.memory_space<vmem>>, vector<2x4x256xf32>
    %1 = arith.mulf %0, %0 : vector<2x4x256xf32>
    %cst = arith.constant dense<0.000000e+00> : vector<2x256xf32>
    %2 = vector.multi_reduction <add>, %1, %cst [1] : vector<2x4x256xf32> to vector<2x256xf32>
    %3 = vector.shape_cast %2 : vector<2x256xf32> to vector<2x1x256xf32>
    %4 = math.sqrt %3 : vector<2x1x256xf32>
    %cst_2 = arith.constant 9.99999997E-7 : f32
    %5 = vector.broadcast %cst_2 : f32 to vector<2x1x256xf32>
    %6 = arith.addf %4, %5 : vector<2x1x256xf32>
    %cst_3 = arith.constant 1.000000e+00 : f32
    %7 = vector.broadcast %cst_3 : f32 to vector<2x1x256xf32>
    %8 = arith.divf %7, %6 : vector<2x1x256xf32>
    %9 = vector.broadcast %8 : vector<2x1x256xf32> to vector<2x4x256xf32>
    %10 = arith.mulf %0, %9 : vector<2x4x256xf32>
    %c0_4 = arith.constant 0 : index
    %c0_5 = arith.constant 0 : index
    %c0_6 = arith.constant 0 : index
    %11 = vector.load %arg3[%c0_4, %c0_5, %c0_6] : memref<2x4x256xf32, #tpu.memory_space<vmem>>, vector<2x4x256xf32>
    tpu.vector_store %arg3[%c0_4, %c0_5, %c0_6], %10 {strides = array<i32>} : memref<2x4x256xf32, #tpu.memory_space<vmem>>, vector<2x4x256xf32>,
    return
  }
  func.func @transform_0(%arg0: i32, %arg1: i32) -> (i32, i32, i32) {
    %c0_i32 = arith.constant 0 : i32
    %c0_i32_0 = arith.constant 0 : i32
    return %arg0, %c0_i32, %arg1 : i32, i32, i32
  }
  func.func @transform_1(%arg0: i32, %arg1: i32) -> (i32, i32, i32) {
    %c0_i32 = arith.constant 0 : i32
    %c0_i32_0 = arith.constant 0 : i32
    return %arg0, %c0_i32, %arg1 : i32, i32, i32
  }
}

</mosaic_0001>

<llo_original>
// kernel: tpu_custom_call.1
$region0: #{tpu_custom_call.1}
  #allocation0 [shape = 'u32[]', space=smem, size = 0x4, offset = 0x4, fixed_abs, tag = 'smem constant byte address 0x4 - core index']
  #allocation1 [shape = 'u32[72,128]{1,0:T(1,128)}', space=vmem, size = 0x9000, scoped, tag = 'internal scratch']
  %s0 = inlined_call_operand.hbm [shape: f32[2,4,256], index: 0, kind: input, shape index: {}]
  %s1 = inlined_call_operand.hbm [shape: f32[2,4,256], index: 1, kind: output, shape index: {}]
  %s2 = sld [smem:[#allocation0]]
  $region18: #{tpu_custom_call.1} parent=0
    _
  %s4 = ssub.s32 1, %s2
  %s5 = scalar_select 0, %s4, %s2
  $region1: #{tpu_custom_call.1} parent=0
    #allocation2 [shape = 'u8[8192]{0}', space=vmem, size = 0x2000, scoped, tag = 'input window, operand 0, single buffered']
    #allocation3 [shape = 's32[1]{0}', space=sflag, size = 0x4, scoped, tag = 'scoped memory for tpu_custom_call.1']
    #allocation4 [shape = 's32[1]{0}', space=sflag, size = 0x4, scoped, tag = 'scoped memory for tpu_custom_call.1']
    #allocation5 [shape = 'u8[8192]{0}', space=vmem, size = 0x2000, scoped, tag = 'output window, operand 0, single buffered']
    %6 = vsyncpa [#allocation3], 0
    %7 = vsyncpa [#allocation4], 0
    // Predicated region
    $region2: #{tpu_custom_call.1} parent=1 // pred_check
      _
    $region3: #{tpu_custom_call.1} parent=1 // pred_check_branch
      %9 = sbr.rel (0) target = $region5
    $region4: #{tpu_custom_call.1} parent=1 // pred_region
      %11 = vsyncadd [#allocation3], 0
      %s12 = sshll.u32 %s0, 4
      %s13 = int_to_ptr.hbm [resolvable:$true] %s12
      %s14 = sshll.u32 [#allocation2], 4
      %s15 = int_to_ptr.vmem [resolvable:$true] %s14
      %20 = dma.hbm_to_vmem [thread:$0]  %s13, 256, %s15, [#allocation3], 128, 128, 8
    $region5: #{tpu_custom_call.1} parent=1 // pred_fallthru
      _
    // Predicated region
    $region6: #{tpu_custom_call.1} parent=1 // pred_check
      _
    $region7: #{tpu_custom_call.1} parent=1 // pred_check_branch
      %22 = sbr.rel (0) target = $region9
    $region8: #{tpu_custom_call.1} parent=1 // pred_region
      %24 = dma.done [#allocation3], 256
    $region9: #{tpu_custom_call.1} parent=1 // pred_fallthru
      _
    %v25 = vld [vmem:[#allocation2] sm:$0xff]
    %v26 = vld [vmem:[#allocation2 + $0x8] sm:$0xff]
    %v27 = vmul.f32 %v25, %v25
    %v28 = vmul.f32 %v26, %v26
    %31 = vst [vmem:[#allocation1] ss:$2 sm:$0xff] %v27
    %v32 = vld.sshfl [vmem:[#allocation1] sm:$0xff pattern:$0x75316420]
    %v33 = vld.sshfl [vmem:[#allocation1 + $0x8] sm:$0xff pattern:$0x75316420]
    %s34 = scalar_lea.vmem [#allocation1], 16
    %35 = vst [vmem:[%s34] ss:$2 sm:$0xff] %v28
    %v36 = vld.sshfl [vmem:[#allocation1 + $0x10] sm:$0xff pattern:$0x75316420]
    %v37 = vld.sshfl [vmem:[#allocation1 + $0x18] sm:$0xff pattern:$0x75316420]
    %vm42 = vcmask 1043456
    %v43 = vsel %vm42, %v32, 0.0
    %v44 = vrot.slane %v43, 4
    %v45 = vadd.f32 %v43, %v44
    %v46 = vrot.slane %v45, 2
    %v47 = vadd.f32 %v45, %v46
    %v48 = vrot.slane %v47, 1
    %v49 = vadd.f32 %v47, %v48
    %v50 = vsel %vm42, %v33, 0.0
    %v51 = vrot.slane %v50, 4
    %v52 = vadd.f32 %v50, %v51
    %v53 = vrot.slane %v52, 2
    %v54 = vadd.f32 %v52, %v53
    %v55 = vrot.slane %v54, 1
    %v56 = vadd.f32 %v54, %v55
    %v57 = vsel %vm42, %v36, 0.0
    %v58 = vrot.slane %v57, 4
    %v59 = vadd.f32 %v57, %v58
    %v60 = vrot.slane %v59, 2
    %v61 = vadd.f32 %v59, %v60
    %v62 = vrot.slane %v61, 1
    %v63 = vadd.f32 %v61, %v62
    %v64 = vsel %vm42, %v37, 0.0
    %v65 = vrot.slane %v64, 4
    %v66 = vadd.f32 %v64, %v65
    %v67 = vrot.slane %v66, 2
    %v68 = vadd.f32 %v66, %v67
    %v69 = vrot.slane %v68, 1
    %v70 = vadd.f32 %v68, %v69
    %v71 = vrsqrt.pop %v49
    %v72 = vmul.f32 %v71, %v49
    %v73 = vmul.f32 %v72, %v71
    %v74 = vmul.f32 0.5, %v73
    %v75 = vsub.f32 1.5, %v74
    %v76 = vmul.f32 %v71, %v75
    %v77 = vmul.f32 %v49, %v76
    %vm78 = vcmp.eq.f32.partialorder %v49, inf
    %v79 = vsel %vm78, %v49, %v77
    %vm80 = vcmp.eq.f32.partialorder %v49, 0.0
    %v81 = vand.u32 %v49, 2147483648
    %v82 = vsel %vm80, %v81, %v79
    %v83 = vrsqrt.pop %v56
    %v84 = vmul.f32 %v83, %v56
    %v85 = vmul.f32 %v84, %v83
    %v86 = vmul.f32 0.5, %v85
    %v87 = vsub.f32 1.5, %v86
    %v88 = vmul.f32 %v83, %v87
    %v89 = vmul.f32 %v56, %v88
    %vm90 = vcmp.eq.f32.partialorder %v56, inf
    %v91 = vsel %vm90, %v56, %v89
    %vm92 = vcmp.eq.f32.partialorder %v56, 0.0
    %v93 = vand.u32 %v56, 2147483648
    %v94 = vsel %vm92, %v93, %v91
    %v95 = vrsqrt.pop %v63
    %v96 = vmul.f32 %v95, %v63
    %v97 = vmul.f32 %v96, %v95
    %v98 = vmul.f32 0.5, %v97
    %v99 = vsub.f32 1.5, %v98
    %v100 = vmul.f32 %v95, %v99
    %v101 = vmul.f32 %v63, %v100
    %vm102 = vcmp.eq.f32.partialorder %v63, inf
    %v103 = vsel %vm102, %v63, %v101
    %vm104 = vcmp.eq.f32.partialorder %v63, 0.0
    %v105 = vand.u32 %v63, 2147483648
    %v106 = vsel %vm104, %v105, %v103
    %v107 = vrsqrt.pop %v70
    %v108 = vmul.f32 %v107, %v70
    %v109 = vmul.f32 %v108, %v107
    %v110 = vmul.f32 0.5, %v109
    %v111 = vsub.f32 1.5, %v110
    %v112 = vmul.f32 %v107, %v111
    %v113 = vmul.f32 %v70, %v112
    %vm114 = vcmp.eq.f32.partialorder %v70, inf
    %v115 = vsel %vm114, %v70, %v113
    %vm116 = vcmp.eq.f32.partialorder %v70, 0.0
    %v117 = vand.u32 %v70, 2147483648
    %v118 = vsel %vm116, %v117, %v115
    %v119 = vadd.f32 %v82, 1e-06
    %v120 = vadd.f32 %v94, 1e-06
    %v121 = vadd.f32 %v106, 1e-06
    %v122 = vadd.f32 %v118, 1e-06
    %v123 = vrcp.pop %v119
    %v124 = vmul.f32 %v119, %v123
    %v125 = vsub.f32 1.0, %v124
    %v126 = vmul.f32 %v123, %v125
    %v127 = vadd.f32 %v123, %v126
    %vm128 = vweird.f32 %v119
    %vm129 = vweird.f32 %v123
    %vm130 = vmor %vm128, %vm129
    %v131 = vsel %vm130, %v123, %v127
    %v132 = vand.u32 2147483647, %v119
    %vm133 = vcmp.eq.f32.partialorder %v132, 8.507059e+37
    %v134 = vand.u32 %v119, 2147483648
    %v135 = vor.u32 1.1754944e-38, %v134
    %v136 = vsel %vm133, %v135, %v131
    %v137 = vmul.f32 1.0, %v136
    %v138 = vrcp.pop %v120
    %v139 = vmul.f32 %v120, %v138
    %v140 = vsub.f32 1.0, %v139
    %v141 = vmul.f32 %v138, %v140
    %v142 = vadd.f32 %v138, %v141
    %vm143 = vweird.f32 %v120
    %vm144 = vweird.f32 %v138
    %vm145 = vmor %vm143, %vm144
    %v146 = vsel %vm145, %v138, %v142
    %v147 = vand.u32 2147483647, %v120
    %vm148 = vcmp.eq.f32.partialorder %v147, 8.507059e+37
    %v149 = vand.u32 %v120, 2147483648
    %v150 = vor.u32 1.1754944e-38, %v149
    %v151 = vsel %vm148, %v150, %v146
    %v152 = vmul.f32 1.0, %v151
    %v153 = vrcp.pop %v121
    %v154 = vmul.f32 %v121, %v153
    %v155 = vsub.f32 1.0, %v154
    %v156 = vmul.f32 %v153, %v155
    %v157 = vadd.f32 %v153, %v156
    %vm158 = vweird.f32 %v121
    %vm159 = vweird.f32 %v153
    %vm160 = vmor %vm158, %vm159
    %v161 = vsel %vm160, %v153, %v157
    %v162 = vand.u32 2147483647, %v121
    %vm163 = vcmp.eq.f32.partialorder %v162, 8.507059e+37
    %v164 = vand.u32 %v121, 2147483648
    %v165 = vor.u32 1.1754944e-38, %v164
    %v166 = vsel %vm163, %v165, %v161
    %v167 = vmul.f32 1.0, %v166
    %v168 = vrcp.pop %v122
    %v169 = vmul.f32 %v122, %v168
    %v170 = vsub.f32 1.0, %v169
    %v171 = vmul.f32 %v168, %v170
    %v172 = vadd.f32 %v168, %v171
    %vm173 = vweird.f32 %v122
    %vm174 = vweird.f32 %v168
    %vm175 = vmor %vm173, %vm174
    %v176 = vsel %vm175, %v168, %v172
    %v177 = vand.u32 2147483647, %v122
    %vm178 = vcmp.eq.f32.partialorder %v177, 8.507059e+37
    %v179 = vand.u32 %v122, 2147483648
    %v180 = vor.u32 1.1754944e-38, %v179
    %v181 = vsel %vm178, %v180, %v176
    %v182 = vmul.f32 1.0, %v181
    %v187 = vrot.slane %v152, 4
    %v188 = vrot.slane %v182, 4
    %v189 = vsel %vm42, %v137, %v187
    %v190 = vsel %vm42, %v167, %v188
    %v193 = vmul.f32 %v25, %v189
    %v194 = vmul.f32 %v26, %v190
    %195 = vst [vmem:[#allocation5] sm:$0xff] %v193
    %196 = vst [vmem:[#allocation5 + $0x8] sm:$0xff] %v194
    // Predicated region
    $region10: #{tpu_custom_call.1} parent=1 // pred_check
      _
    $region11: #{tpu_custom_call.1} parent=1 // pred_check_branch
      %198 = sbr.rel (0) target = $region13
    $region12: #{tpu_custom_call.1} parent=1 // pred_region
      %200 = vsyncadd [#allocation4], 0
      %s201 = sshll.u32 [#allocation5], 4
      %s202 = int_to_ptr.vmem [resolvable:$true] %s201
      %s203 = sshll.u32 %s1, 4
      %s204 = int_to_ptr.hbm [resolvable:$true] %s203
      %209 = dma.vmem_to_hbm [thread:$0]  %s202, 256, %s204, [#allocation4], 128, 128, 8
    $region13: #{tpu_custom_call.1} parent=1 // pred_fallthru
      _
    // Predicated region
    $region14: #{tpu_custom_call.1} parent=1 // pred_check
      _
    $region15: #{tpu_custom_call.1} parent=1 // pred_check_branch
      %211 = sbr.rel (0) target = $region17
    $region16: #{tpu_custom_call.1} parent=1 // pred_region
      %213 = dma.done [#allocation4], 256
    $region17: #{tpu_custom_call.1} parent=1 // pred_fallthru
      _
    %214 = vsyncpa [#allocation3], 1
    %215 = vsyncpa [#allocation4], 1

</llo_original>
